<compile_context>
chip_gen: v7x
topology: tpu7x:2x2x1
jax: 0.10.0
libtpu: 0.0.40
codegen_flags: <defaults>
</compile_context>

<pallas_src>
import functools

import jax
import jax.numpy as jnp
from jax.experimental import pallas as pl
from jax.experimental.pallas import tpu as pltpu


# ---------------------------------------------------------------------------
# Fused per-image kernel: pool -> squeeze(1x1)+ReLU -> excite(1x1) -> HSigmoid
# -> rescale the resident (C, HW) slab.
# ---------------------------------------------------------------------------
def _se_fused_kernel(x_ref, w1t_ref, b1_ref, w2_ref, b2_ref, o_ref, *,
                     inv_hw, chunked):
    """x_ref/o_ref: [C, HW]. w1t_ref: [C, CR]. b1_ref: [1, CR].
    w2_ref: [C, CR]. b2_ref: [C, 1]."""
    c, hw = x_ref.shape

    # --- global average pool: per-channel sums, channels on sublanes -------
    if chunked:
        # VPU adds over 128-lane chunks; one XLU lane reduce at the end.
        acc = x_ref[:, 0:128].astype(jnp.float32)
        for k in range(1, hw // 128):
            acc = acc + x_ref[:, k * 128:(k + 1) * 128].astype(jnp.float32)
        s = jnp.sum(acc, axis=1, keepdims=True) * inv_hw              # [C, 1]
    else:
        s = jnp.sum(x_ref[...].astype(jnp.float32), axis=1,
                    keepdims=True) * inv_hw                           # [C, 1]

    # --- squeeze 1x1 conv + ReLU (broadcast mul + sublane reduce; no MXU,
    #     no transposes needed for these vanishingly small matvecs) ---------
    z = jnp.sum(w1t_ref[...] * s, axis=0, keepdims=True) + b1_ref[...]  # [1, CR]
    z = jnp.maximum(z, 0.0)

    # --- excite 1x1 conv + HSigmoid ----------------------------------------
    e = jnp.sum(w2_ref[...] * z, axis=1, keepdims=True) + b2_ref[...]   # [C, 1]
    gate = jnp.clip(e + 3.0, 0.0, 6.0) * (1.0 / 6.0)                    # [C, 1]

    # --- rescale the resident slab in its native dtype ---------------------
    o_ref[...] = (x_ref[...] * gate.astype(o_ref.dtype)).astype(o_ref.dtype)


# ---------------------------------------------------------------------------
# Tiled fallback kernels (slabs that do not fit VMEM)
# ---------------------------------------------------------------------------
def _pool_kernel(x_ref, sum_ref, acc_ref, *, chunked):
    """Spatial-sum accumulation.  x_ref: [bm, bhw], sum_ref: [bm, 1],
    acc_ref: [bm, 128] f32 scratch (lane-dense partial sums)."""
    @pl.when(pl.program_id(1) == 0)
    def _():
        acc_ref[...] = jnp.zeros_like(acc_ref)

    if chunked:
        # VPU adds into the lane-dense accumulator; XLU only once at the end.
        for k in range(x_ref.shape[1] // 128):
            acc_ref[...] += x_ref[:, k * 128:(k + 1) * 128].astype(jnp.float32)
    else:
        acc_ref[:, 0:1] += jnp.sum(x_ref[...].astype(jnp.float32), axis=1,
                                   keepdims=True)

    @pl.when(pl.program_id(1) == pl.num_programs(1) - 1)
    def _():
        sum_ref[...] = jnp.sum(acc_ref[...], axis=1, keepdims=True)


def _scale_kernel(x_ref, gate_ref, o_ref):
    """out = x * per-row gate (native dtype).  x/o: [bm, bhw], gate: [bm, 1]."""
    o_ref[...] = (x_ref[...] * gate_ref[...]).astype(o_ref.dtype)


# ---------------------------------------------------------------------------
# Helpers
# ---------------------------------------------------------------------------
def _sublane_align(dtype):
    # dtype-dependent sublane alignment: 8 (f32), 16 (bf16), 32 (int8).
    return max(8, 32 // jnp.dtype(dtype).itemsize)


def _pick_block(dim, align, target):
    """Largest block <= target that is a multiple of `align` and divides dim;
    falls back to the full dim (always a legal BlockSpec)."""
    if dim <= target:
        return dim
    b = (target // align) * align
    while b >= align:
        if dim % b == 0:
            return b
        b -= align
    # TODO(synk): for huge dims with no aligned divisor, pad to a multiple of
    # 128 instead of taking a full-dim block.
    return dim


# ---------------------------------------------------------------------------
# Factory: preps weights once, returns a jitted forward(x)
# ---------------------------------------------------------------------------
def make_squeeze_excite(w1, b1, w2, b2, *, reduction=4,
                        fused_vmem_budget=24 * 1024 * 1024,
                        bm_target=256, bhw_target=2048):
    """Build a jitted SqueezeExcite forward.

    Weight preparation (DynamicConv2d idx==0 / groups=1 slicing, transpose,
    f32 cast) happens exactly once here and is closed over by the jitted
    forward, so no per-call glue ops are launched.
    """
    c = w1.shape[1]                       # in_channel (idx==0 slicing path)
    cr = c // reduction                   # squeeze channels

    # Gate operands laid out so the in-kernel math needs no transposes:
    #   w1_t[C, CR]  squeeze weight (channels on sublanes)
    #   b1_row[1,CR] squeeze bias
    #   w2_m[C, CR]  excite weight (native conv orientation)
    #   b2_col[C,1]  excite bias
    w1_t = jnp.transpose(w1[:cr, :c, 0, 0], (1, 0)).astype(jnp.float32)
    b1_row = b1[:cr].reshape(1, cr).astype(jnp.float32)
    w2_m = w2[:c, :cr, 0, 0].astype(jnp.float32)
    b2_col = b2[:c].reshape(c, 1).astype(jnp.float32)
    w_bytes = int(w1_t.size + b1_row.size + w2_m.size + b2_col.size) * 4

    @jax.jit
    def forward(x):
        n, xc, h, wd = x.shape
        assert xc == c, f"expected {c} channels, got {xc}"
        hw = h * wd
        inv_hw = 1.0 / hw
        slab_bytes = c * hw * x.dtype.itemsize

        # ------------------------------------------------------------------
        # Fused single-pass path: one grid step per image; (C, HW) slab
        # resident in VMEM (2x double-buffered in + 2x out + weights).
        # ------------------------------------------------------------------
        if 4 * slab_bytes + w_bytes + 128 * c * 4 <= fused_vmem_budget:
            chunked = (hw % 128 == 0) and (128 < hw <= 64 * 128) and (c <= 128)
            x3 = x.reshape(n, c, hw)                     # free view of NCHW
            out = pl.pallas_call(
                functools.partial(_se_fused_kernel, inv_hw=inv_hw,
                                  chunked=chunked),
                out_shape=jax.ShapeDtypeStruct((n, c, hw), x.dtype),
                grid=(n,),
                in_specs=[
                    pl.BlockSpec((None, c, hw), lambda i: (i, 0, 0)),
                    pl.BlockSpec((c, cr), lambda i: (0, 0)),
                    pl.BlockSpec((1, cr), lambda i: (0, 0)),
                    pl.BlockSpec((c, cr), lambda i: (0, 0)),
                    pl.BlockSpec((c, 1), lambda i: (0, 0)),
                ],
                out_specs=pl.BlockSpec((None, c, hw), lambda i: (i, 0, 0)),
                # Images are independent -> "parallel" (megacore-shardable).
                # TODO(synk): on v7x confirm the batch axis splits across both
                # TensorCores; otherwise switch to pltpu.CORE_PARALLEL.
                compiler_params=pltpu.CompilerParams(
                    dimension_semantics=("parallel",),
                    vmem_limit_bytes=32 * 1024 * 1024),
            )(x3, w1_t, b1_row, w2_m, b2_col)
            return out.reshape(n, c, h, wd)

        # ------------------------------------------------------------------
        # Tiled fallback for slabs that do not fit VMEM:
        #   pass 1: pooled sums (resident (bm,1) output, VPU-chunk accum)
        #   gate  : tiny [N, C] math in plain jnp (one XLA fusion, no launch)
        #   pass 2: lane-dense broadcast rescale
        # ------------------------------------------------------------------
        m = n * c
        x2d = x.reshape(m, hw)                           # free view of NCHW
        bm = _pick_block(m, _sublane_align(x.dtype), bm_target)
        bhw = _pick_block(hw, 128, bhw_target)
        m_tiles, hw_tiles = m // bm, hw // bhw
        chunked = (bhw % 128 == 0) and (128 < bhw <= 64 * 128)

        sums = pl.pallas_call(
            functools.partial(_pool_kernel, chunked=chunked),
            out_shape=jax.ShapeDtypeStruct((m, 1), jnp.float32),
            grid=(m_tiles, hw_tiles),
            in_specs=[pl.BlockSpec((bm, bhw), lambda i, j: (i, j))],
            out_specs=pl.BlockSpec((bm, 1), lambda i, j: (i, 0)),
            scratch_shapes=[pltpu.VMEM((bm, 128), jnp.float32)],
            compiler_params=pltpu.CompilerParams(
                dimension_semantics=("parallel", "arbitrary")),
        )(x2d)

        s = sums.reshape(n, c) * inv_hw                              # [N, C]
        z = jnp.maximum(s @ w1_t + b1_row, 0.0)                      # [N, CR]
        e = z @ w2_m.T + b2_col.reshape(1, c)                        # [N, C]
        gate = jnp.clip(e + 3.0, 0.0, 6.0) * (1.0 / 6.0)
        gate = gate.reshape(m, 1).astype(x.dtype)                    # native mul

        out2d = pl.pallas_call(
            _scale_kernel,
            out_shape=jax.ShapeDtypeStruct((m, hw), x.dtype),
            grid=(m_tiles, hw_tiles),
            in_specs=[
                pl.BlockSpec((bm, bhw), lambda i, j: (i, j)),
                # j is the innermost grid axis and the gate block index only
                # depends on i, so the tiny gate block is never re-DMA'd.
                pl.BlockSpec((bm, 1), lambda i, j: (i, 0)),
            ],
            out_specs=pl.BlockSpec((bm, bhw), lambda i, j: (i, j)),
            compiler_params=pltpu.CompilerParams(
                dimension_semantics=("parallel", "parallel")),
        )(x2d, gate)
        return out2d.reshape(n, c, h, wd)

    return forward


# ---------------------------------------------------------------------------
# Pure-JAX reference (mirrors the PyTorch forward)
# ---------------------------------------------------------------------------
def _reference(x, w1, b1, w2, b2, *, reduction=4):
    n, c, _, _ = x.shape
    cr = c // reduction
    s = x.reshape(n, c, -1).mean(-1)                              # [N, C]
    z = jnp.maximum(s @ w1[:cr, :c, 0, 0].T + b1[:cr], 0.0)       # squeeze+ReLU
    e = z @ w2[:c, :cr, 0, 0].T + b2[:c]                          # excite
    gate = jnp.clip(e + 3.0, 0.0, 6.0) / 6.0                      # HSigmoid
    return x * gate[:, :, None, None]


if __name__ == "__main__":
    # Small shapes consistent with the module: batch=2, channels=8,
    # spatial=16x16, reduction=4 (squeeze channels = 2).
    N, C, H, W = 2, 8, 16, 16
    REDUCTION = 4
    CR = C // REDUCTION

    key = jax.random.PRNGKey(0)
    kx, kw1, kb1, kw2, kb2 = jax.random.split(key, 5)
    x = jax.random.normal(kx, (N, C, H, W), dtype=jnp.float32)
    w1 = 0.3 * jax.random.normal(kw1, (CR, C, 1, 1), dtype=jnp.float32)  # squeeze
    b1 = 0.1 * jax.random.normal(kb1, (CR,), dtype=jnp.float32)
    w2 = 0.3 * jax.random.normal(kw2, (C, CR, 1, 1), dtype=jnp.float32)  # excite
    b2 = 0.1 * jax.random.normal(kb2, (C,), dtype=jnp.float32)

    ref = _reference(x, w1, b1, w2, b2, reduction=REDUCTION)

    # Fused single-pass path (weights prepped once at factory time).
    se = make_squeeze_excite(w1, b1, w2, b2, reduction=REDUCTION)
    out = jax.block_until_ready(se(x))
    assert out.shape == ref.shape, (out.shape, ref.shape)
    err = float(jnp.max(jnp.abs(out - ref)))
    assert err < 1e-4, ("fused", err)

    # Tiled fallback path (forced via a zero fused-VMEM budget) so the
    # large-slab code path is exercised and known-good too.
    se_tiled = make_squeeze_excite(w1, b1, w2, b2, reduction=REDUCTION,
                                   fused_vmem_budget=0)
    out2 = jax.block_until_ready(se_tiled(x))
    err2 = float(jnp.max(jnp.abs(out2 - ref)))
    assert err2 < 1e-4, ("tiled", err2)

    print("KERNEL_OK")
</pallas_src>

<mosaic_0001>
module attributes {stable_mosaic.version = 11 : i64} {
  func.func @_se_fused_kernel(%arg0: i32, %arg1: memref<1x8x256xf32, #tpu.memory_space<vmem>>, %arg2: memref<8x2xf32, #tpu.memory_space<vmem>>, %arg3: memref<1x2xf32, #tpu.memory_space<vmem>>, %arg4: memref<8x2xf32, #tpu.memory_space<vmem>>, %arg5: memref<8x1xf32, #tpu.memory_space<vmem>>, %arg6: memref<1x8x256xf32, #tpu.memory_space<vmem>>) attributes {dimension_semantics = [#tpu.dimension_semantics<parallel>], iteration_bounds = array<i64: 2>, scalar_prefetch = 0 : i64, scratch_operands = 0 : i64, tpu.core_type = #tpu.core_type<tc>, window_params = [{transform_indices = @transform_0, window_bounds = array<i64: 1, 8, 256>}, {pipeline_mode = #tpu.pipeline_mode<synchronous>, transform_indices = @transform_1, window_bounds = array<i64: 8, 2>}, {pipeline_mode = #tpu.pipeline_mode<synchronous>, transform_indices = @transform_2, window_bounds = array<i64: 1, 2>}, {pipeline_mode = #tpu.pipeline_mode<synchronous>, transform_indices = @transform_3, window_bounds = array<i64: 8, 2>}, {pipeline_mode = #tpu.pipeline_mode<synchronous>, transform_indices = @transform_4, window_bounds = array<i64: 8, 1>}, {transform_indices = @transform_5, window_bounds = array<i64: 1, 8, 256>}]} {
    %c0 = arith.constant 0 : index
    %c0_0 = arith.constant 0 : index
    %c0_1 = arith.constant 0 : index
    %0 = vector.load %arg1[%c0, %c0_0, %c0_1] : memref<1x8x256xf32, #tpu.memory_space<vmem>>, vector<1x8x128xf32>
    %1 = vector.shape_cast %0 : vector<1x8x128xf32> to vector<8x128xf32>
    %c0_2 = arith.constant 0 : index
    %c0_3 = arith.constant 0 : index
    %c128 = arith.constant 128 : index
    %2 = vector.load %arg1[%c0_2, %c0_3, %c128] : memref<1x8x256xf32, #tpu.memory_space<vmem>>, vector<1x8x128xf32>
    %3 = vector.shape_cast %2 : vector<1x8x128xf32> to vector<8x128xf32>
    %4 = arith.addf %1, %3 : vector<8x128xf32>
    %cst = arith.constant dense<0.000000e+00> : vector<8xf32>
    %5 = vector.multi_reduction <add>, %4, %cst [1] : vector<8x128xf32> to vector<8xf32>
    %6 = vector.shape_cast %5 : vector<8xf32> to vector<8x1xf32>
    %cst_4 = arith.constant 3.906250e-03 : f32
    %7 = vector.broadcast %cst_4 : f32 to vector<8x1xf32>
    %8 = arith.mulf %6, %7 : vector<8x1xf32>
    %c0_5 = arith.constant 0 : index
    %c0_6 = arith.constant 0 : index
    %9 = vector.load %arg2[%c0_5, %c0_6] : memref<8x2xf32, #tpu.memory_space<vmem>>, vector<8x2xf32>
    %10 = vector.broadcast %8 : vector<8x1xf32> to vector<8x2xf32>
    %11 = arith.mulf %9, %10 : vector<8x2xf32>
    %cst_7 = arith.constant dense<0.000000e+00> : vector<2xf32>
    %12 = vector.multi_reduction <add>, %11, %cst_7 [0] : vector<8x2xf32> to vector<2xf32>
    %13 = vector.shape_cast %12 : vector<2xf32> to vector<1x2xf32>
    %c0_8 = arith.constant 0 : index
    %c0_9 = arith.constant 0 : index
    %14 = vector.load %arg3[%c0_8, %c0_9] : memref<1x2xf32, #tpu.memory_space<vmem>>, vector<1x2xf32>
    %15 = arith.addf %13, %14 : vector<1x2xf32>
    %cst_10 = arith.constant 0.000000e+00 : f32
    %16 = vector.broadcast %cst_10 : f32 to vector<1x2xf32>
    %17 = arith.maximumf %15, %16 : vector<1x2xf32>
    %c0_11 = arith.constant 0 : index
    %c0_12 = arith.constant 0 : index
    %18 = vector.load %arg4[%c0_11, %c0_12] : memref<8x2xf32, #tpu.memory_space<vmem>>, vector<8x2xf32>
    %19 = vector.broadcast %17 : vector<1x2xf32> to vector<8x2xf32>
    %20 = arith.mulf %18, %19 : vector<8x2xf32>
    %cst_13 = arith.constant dense<0.000000e+00> : vector<8xf32>
    %21 = vector.multi_reduction <add>, %20, %cst_13 [1] : vector<8x2xf32> to vector<8xf32>
    %22 = vector.shape_cast %21 : vector<8xf32> to vector<8x1xf32>
    %c0_14 = arith.constant 0 : index
    %c0_15 = arith.constant 0 : index
    %23 = vector.load %arg5[%c0_14, %c0_15] : memref<8x1xf32, #tpu.memory_space<vmem>>, vector<8x1xf32>
    %24 = arith.addf %22, %23 : vector<8x1xf32>
    %cst_16 = arith.constant 3.000000e+00 : f32
    %25 = vector.broadcast %cst_16 : f32 to vector<8x1xf32>
    %26 = arith.addf %24, %25 : vector<8x1xf32>
    %cst_17 = arith.constant 0.000000e+00 : f32
    %cst_18 = arith.constant 6.000000e+00 : f32
    %27 = vector.broadcast %cst_17 : f32 to vector<8x1xf32>
    %28 = arith.maximumf %27, %26 : vector<8x1xf32>
    %29 = vector.broadcast %cst_18 : f32 to vector<8x1xf32>
    %30 = arith.minimumf %29, %28 : vector<8x1xf32>
    %cst_19 = arith.constant 0.166666672 : f32
    %31 = vector.broadcast %cst_19 : f32 to vector<8x1xf32>
    %32 = arith.mulf %30, %31 : vector<8x1xf32>
    %c0_20 = arith.constant 0 : index
    %c0_21 = arith.constant 0 : index
    %c0_22 = arith.constant 0 : index
    %33 = vector.load %arg1[%c0_20, %c0_21, %c0_22] : memref<1x8x256xf32, #tpu.memory_space<vmem>>, vector<1x8x256xf32>
    %34 = vector.shape_cast %33 : vector<1x8x256xf32> to vector<8x256xf32>
    %35 = vector.broadcast %32 : vector<8x1xf32> to vector<8x256xf32>
    %36 = arith.mulf %34, %35 : vector<8x256xf32>
    %c0_23 = arith.constant 0 : index
    %c0_24 = arith.constant 0 : index
    %c0_25 = arith.constant 0 : index
    %37 = vector.load %arg6[%c0_23, %c0_24, %c0_25] : memref<1x8x256xf32, #tpu.memory_space<vmem>>, vector<1x8x256xf32>
    %38 = vector.shape_cast %37 : vector<1x8x256xf32> to vector<8x256xf32>
    %39 = vector.shape_cast %36 : vector<8x256xf32> to vector<1x8x256xf32>
    tpu.vector_store %arg6[%c0_23, %c0_24, %c0_25], %39 {strides = array<i32>} : memref<1x8x256xf32, #tpu.memory_space<vmem>>, vector<1x8x256xf32>,
    return
  }
  func.func @transform_0(%arg0: i32) -> (i32, i32, i32) {
    %c0_i32 = arith.constant 0 : i32
    %c0_i32_0 = arith.constant 0 : i32
    %c0_i32_1 = arith.constant 0 : i32
    return %arg0, %c0_i32, %c0_i32_0 : i32, i32, i32
  }
  func.func @transform_1(%arg0: i32) -> (i32, i32) {
    %c0_i32 = arith.constant 0 : i32
    %c0_i32_0 = arith.constant 0 : i32
    %c0_i32_1 = arith.constant 0 : i32
    return %c0_i32, %c0_i32_0 : i32, i32
  }
  func.func @transform_2(%arg0: i32) -> (i32, i32) {
    %c0_i32 = arith.constant 0 : i32
    %c0_i32_0 = arith.constant 0 : i32
    %c0_i32_1 = arith.constant 0 : i32
    return %c0_i32, %c0_i32_0 : i32, i32
  }
  func.func @transform_3(%arg0: i32) -> (i32, i32) {
    %c0_i32 = arith.constant 0 : i32
    %c0_i32_0 = arith.constant 0 : i32
    %c0_i32_1 = arith.constant 0 : i32
    return %c0_i32, %c0_i32_0 : i32, i32
  }
  func.func @transform_4(%arg0: i32) -> (i32, i32) {
    %c0_i32 = arith.constant 0 : i32
    %c0_i32_0 = arith.constant 0 : i32
    %c0_i32_1 = arith.constant 0 : i32
    return %c0_i32, %c0_i32_0 : i32, i32
  }
  func.func @transform_5(%arg0: i32) -> (i32, i32, i32) {
    %c0_i32 = arith.constant 0 : i32
    %c0_i32_0 = arith.constant 0 : i32
    %c0_i32_1 = arith.constant 0 : i32
    return %arg0, %c0_i32, %c0_i32_0 : i32, i32, i32
  }
}

</mosaic_0001>

<llo_original>
// kernel: forward.1
$region0: #{forward.1}
  #allocation0 [shape = 'u32[]', space=smem, size = 0x4, offset = 0x4, fixed_abs, tag = 'smem constant byte address 0x4 - core index']
  #allocation1 [shape = 'u32[144,128]{1,0:T(1,128)}', space=vmem, size = 0x12000, scoped, tag = 'internal scratch']
  %s0 = inlined_call_operand.vmem [shape: f32[2,8,256], index: 0, kind: input, shape index: {}]
  %s1 = inlined_call_operand.vmem [shape: f32[8,2], index: 1, kind: input, shape index: {}]
  %s2 = inlined_call_operand.vmem [shape: f32[1,2], index: 2, kind: input, shape index: {}]
  %s3 = inlined_call_operand.vmem [shape: f32[8,2], index: 3, kind: input, shape index: {}]
  %s4 = inlined_call_operand.vmem [shape: f32[8,1], index: 4, kind: input, shape index: {}]
  %s5 = inlined_call_operand.vmem [shape: f32[2,8,256], index: 5, kind: output, shape index: {}]
  %s6 = sld [smem:[#allocation0]]
  $region53: #{forward.1} parent=0
    _
  %s8 = ssub.s32 1, %s6
  %s9 = scalar_select 0, %s8, %s6
  loop: start=0, step=1, limit=4
  $region2: #{forward.1} parent=0 // loop_pre_header
    _
  $region3: #{forward.1} parent=0 // loop_header
    %s11 = sphi 0, %s15
    %p12 = scmp.ge.s32.totalorder %s11, 4
    %s21 = sphi 0, %s23
    %s24 = sphi 0, %s21
    %s25 = sphi 0, %s24
    %s41 = sphi 0, %s25
    %s45 = sphi 0, %s45
    %s47 = sphi 0, %s45
    %s48 = sphi 0, %s47
    %s62 = sphi 0, %s48
    %s66 = sphi 0, %s66
    %s68 = sphi 0, %s66
    %s69 = sphi 0, %s68
    %s83 = sphi 0, %s69
    %s87 = sphi 0, %s87
    %s89 = sphi 0, %s87
    %s90 = sphi 0, %s89
    %s104 = sphi 0, %s90
    %s108 = sphi 0, %s108
    %s110 = sphi 0, %s108
    %s111 = sphi 0, %s110
    %s125 = sphi 0, %s111
    %s131 = sphi 0, %s133
    %s134 = sphi 0, %s131
    %s135 = sphi 0, %s134
    %s151 = sphi 0, %s135
  $region4: #{forward.1} parent=0 // loop_header_branch
    %14 = sbr.rel (%p12) target = $region8
  $region5: #{forward.1} parent=0 // loop_body
    %s16 = ssub.s32 %s11, 1
    %s17 = ssub.s32 %s11, 2
    %s18 = sadd.s32 %s11, 1
    %s19 = ssub.s32 %s11, %s18
    %p20 = scmp.eq.s32.totalorder %s19, 0
    %s22 = sadd.s32 %s21, 1
    %s23 = scalar_select %p20, %s21, %s22
    %p26 = pneg %p20
    %p27 = scmp.eq.s32.totalorder %s11, 1
    %p28 = por %p26, %p27
    %p29 = scmp.ne.s32.totalorder %s21, %s24
    %p30 = scmp.eq.s32.totalorder %s11, 0
    %p31 = por %p29, %p30
    %p32 = scmp.ne.s32.totalorder %s21, %s24
    %p33 = scmp.eq.s32.totalorder %s16, 1
    %p34 = por %p32, %p33
    %p35 = scmp.ne.s32.totalorder %s24, %s25
    %p36 = scmp.eq.s32.totalorder %s16, 0
    %p37 = por %p35, %p36
    %p38 = scmp.ne.s32.totalorder %s24, %s25
    %p39 = scmp.eq.s32.totalorder %s17, 1
    %p40 = por %p38, %p39
    %p42 = scmp.ne.s32.totalorder %s25, %s41
    %p43 = scmp.eq.s32.totalorder %s17, 0
    %p44 = por %p42, %p43
    %s46 = sadd.s32 %s45, 1
    %p49 = scmp.eq.s32.totalorder %s11, 1
    %p50 = scmp.ne.s32.totalorder %s45, %s47
    %p51 = scmp.eq.s32.totalorder %s11, 0
    %p52 = por %p50, %p51
    %p53 = scmp.ne.s32.totalorder %s45, %s47
    %p54 = scmp.eq.s32.totalorder %s16, 1
    %p55 = por %p53, %p54
    %p56 = scmp.ne.s32.totalorder %s47, %s48
    %p57 = scmp.eq.s32.totalorder %s16, 0
    %p58 = por %p56, %p57
    %p59 = scmp.ne.s32.totalorder %s47, %s48
    %p60 = scmp.eq.s32.totalorder %s17, 1
    %p61 = por %p59, %p60
    %p63 = scmp.ne.s32.totalorder %s48, %s62
    %p64 = scmp.eq.s32.totalorder %s17, 0
    %p65 = por %p63, %p64
    %s67 = sadd.s32 %s66, 1
    %p70 = scmp.eq.s32.totalorder %s11, 1
    %p71 = scmp.ne.s32.totalorder %s66, %s68
    %p72 = scmp.eq.s32.totalorder %s11, 0
    %p73 = por %p71, %p72
    %p74 = scmp.ne.s32.totalorder %s66, %s68
    %p75 = scmp.eq.s32.totalorder %s16, 1
    %p76 = por %p74, %p75
    %p77 = scmp.ne.s32.totalorder %s68, %s69
    %p78 = scmp.eq.s32.totalorder %s16, 0
    %p79 = por %p77, %p78
    %p80 = scmp.ne.s32.totalorder %s68, %s69
    %p81 = scmp.eq.s32.totalorder %s17, 1
    %p82 = por %p80, %p81
    %p84 = scmp.ne.s32.totalorder %s69, %s83
    %p85 = scmp.eq.s32.totalorder %s17, 0
    %p86 = por %p84, %p85
    %s88 = sadd.s32 %s87, 1
    %p91 = scmp.eq.s32.totalorder %s11, 1
    %p92 = scmp.ne.s32.totalorder %s87, %s89
    %p93 = scmp.eq.s32.totalorder %s11, 0
    %p94 = por %p92, %p93
    %p95 = scmp.ne.s32.totalorder %s87, %s89
    %p96 = scmp.eq.s32.totalorder %s16, 1
    %p97 = por %p95, %p96
    %p98 = scmp.ne.s32.totalorder %s89, %s90
    %p99 = scmp.eq.s32.totalorder %s16, 0
    %p100 = por %p98, %p99
    %p101 = scmp.ne.s32.totalorder %s89, %s90
    %p102 = scmp.eq.s32.totalorder %s17, 1
    %p103 = por %p101, %p102
    %p105 = scmp.ne.s32.totalorder %s90, %s104
    %p106 = scmp.eq.s32.totalorder %s17, 0
    %p107 = por %p105, %p106
    %s109 = sadd.s32 %s108, 1
    %p112 = scmp.eq.s32.totalorder %s11, 1
    %p113 = scmp.ne.s32.totalorder %s108, %s110
    %p114 = scmp.eq.s32.totalorder %s11, 0
    %p115 = por %p113, %p114
    %p116 = scmp.ne.s32.totalorder %s108, %s110
    %p117 = scmp.eq.s32.totalorder %s16, 1
    %p118 = por %p116, %p117
    %p119 = scmp.ne.s32.totalorder %s110, %s111
    %p120 = scmp.eq.s32.totalorder %s16, 0
    %p121 = por %p119, %p120
    %p122 = scmp.ne.s32.totalorder %s110, %s111
    %p123 = scmp.eq.s32.totalorder %s17, 1
    %p124 = por %p122, %p123
    %p126 = scmp.ne.s32.totalorder %s111, %s125
    %p127 = scmp.eq.s32.totalorder %s17, 0
    %p128 = por %p126, %p127
    %s129 = ssub.s32 %s11, %s18
    %p130 = scmp.eq.s32.totalorder %s129, 0
    %s132 = sadd.s32 %s131, 1
    %s133 = scalar_select %p130, %s131, %s132
    %p136 = pneg %p130
    %p137 = scmp.eq.s32.totalorder %s11, 1
    %p138 = por %p136, %p137
    %p139 = scmp.ne.s32.totalorder %s131, %s134
    %p140 = scmp.eq.s32.totalorder %s11, 0
    %p141 = por %p139, %p140
    %p142 = scmp.ne.s32.totalorder %s131, %s134
    %p143 = scmp.eq.s32.totalorder %s16, 1
    %p144 = por %p142, %p143
    %p145 = scmp.ne.s32.totalorder %s134, %s135
    %p146 = scmp.eq.s32.totalorder %s16, 0
    %p147 = por %p145, %p146
    %p148 = scmp.ne.s32.totalorder %s134, %s135
    %p149 = scmp.eq.s32.totalorder %s17, 1
    %p150 = por %p148, %p149
    %p152 = scmp.ne.s32.totalorder %s135, %s151
    %p153 = scmp.eq.s32.totalorder %s17, 0
    %p154 = por %p152, %p153
    %p155 = scmp.le.s32.totalorder 1, %s11
    %p156 = scmp.lt.s32.totalorder %s11, 3
    %p157 = pnand %p155, %p156
    %p158 = pneg %p157
    // Predicated region
    $region9: #{forward.1} parent=5 // pred_check
      _
    $region10: #{forward.1} parent=5 // pred_check_branch
      %160 = sbr.rel (%p157) target = $region12
    $region11: #{forward.1} parent=5 // pred_region
      %s161 = ssub.s32 %s11, 1
      // Predicated region
      $region13: #{forward.1} parent=11 // pred_check
        %p162 = pneg %p58
      $region14: #{forward.1} parent=11 // pred_check_branch
        %164 = sbr.rel (%p162) target = $region16
      $region15: #{forward.1} parent=11 // pred_region
        _
      $region16: #{forward.1} parent=11 // pred_fallthru
        _
      // Predicated region
      $region17: #{forward.1} parent=11 // pred_check
        %p165 = pneg %p79
      $region18: #{forward.1} parent=11 // pred_check_branch
        %167 = sbr.rel (%p165) target = $region20
      $region19: #{forward.1} parent=11 // pred_region
        _
      $region20: #{forward.1} parent=11 // pred_fallthru
        _
      // Predicated region
      $region21: #{forward.1} parent=11 // pred_check
        %p168 = pneg %p100
      $region22: #{forward.1} parent=11 // pred_check_branch
        %170 = sbr.rel (%p168) target = $region24
      $region23: #{forward.1} parent=11 // pred_region
        _
      $region24: #{forward.1} parent=11 // pred_fallthru
        _
      // Predicated region
      $region25: #{forward.1} parent=11 // pred_check
        %p171 = pneg %p121
      $region26: #{forward.1} parent=11 // pred_check_branch
        %173 = sbr.rel (%p171) target = $region28
      $region27: #{forward.1} parent=11 // pred_region
        _
      $region28: #{forward.1} parent=11 // pred_fallthru
        _
    $region12: #{forward.1} parent=5 // pred_fallthru
      _
    %p174 = scmp.lt.s32.totalorder %s11, 2
    // Predicated region
    $region29: #{forward.1} parent=5 // pred_check
      %p175 = pneg %p174
    $region30: #{forward.1} parent=5 // pred_check_branch
      %177 = sbr.rel (%p175) target = $region32
    $region31: #{forward.1} parent=5 // pred_region
      // Predicated region
      $region33: #{forward.1} parent=31 // pred_check
        %p178 = pneg %p31
      $region34: #{forward.1} parent=31 // pred_check_branch
        %180 = sbr.rel (%p178) target = $region36
      $region35: #{forward.1} parent=31 // pred_region
        %p181 = scmp.lt.s32.totalorder %s11, 1
        %s182 = scalar_select %p181, %s11, 1
        %s183 = smul.addr %s182, 2
        %s184 = smul.addr %s183, 8
        %s185 = scalar_lea.vmem %s0, %s184
      $region36: #{forward.1} parent=31 // pred_fallthru
        _
    $region32: #{forward.1} parent=5 // pred_fallthru
      _
    %p186 = scmp.le.s32.totalorder 1, %s11
    %p187 = scmp.lt.s32.totalorder %s11, 3
    %p188 = pnand %p186, %p187
    %p189 = pneg %p188
    // Predicated region
    $region37: #{forward.1} parent=5 // pred_check
      _
    $region38: #{forward.1} parent=5 // pred_check_branch
      %191 = sbr.rel (%p188) target = $region40
    $region39: #{forward.1} parent=5 // pred_region
      %s192 = ssub.s32 %s11, 1
      %p193 = scmp.lt.s32.totalorder %s16, 1
      %s194 = scalar_select %p193, %s16, 1
      %s195 = smul.addr %s194, 2
      %s196 = smul.addr %s195, 8
      %s197 = scalar_lea.vmem %s0, %s196
      %p198 = pneg %p37
      %p199 = pneg %p34
      %p200 = pneg %p58
      %p201 = pneg %p55
      %p202 = pneg %p79
      %p203 = pneg %p76
      %p204 = pneg %p100
      %p205 = pneg %p97
      %p206 = pneg %p121
      %p207 = pneg %p118
      %p208 = pneg %p147
      %p209 = pneg %p144
      %p210 = scmp.lt.s32.totalorder %s16, 1
      %s211 = scalar_select %p210, %s16, 1
      %s212 = smul.addr %s211, 2
      %s213 = smul.addr %s212, 8
      %s214 = scalar_lea.vmem %s5, %s213
      %p215 = scmp.lt.s32.totalorder %s16, 1
      %s216 = scalar_select %p215, %s16, 1
      %s217 = smul.addr %s216, 2
      %s218 = smul.addr %s217, 8
      %s219 = scalar_lea.vmem %s0, %s218
      %p220 = scmp.lt.s32.totalorder %s16, 1
      %s221 = scalar_select %p220, %s16, 1
      %s222 = smul.addr %s221, 2
      %s223 = smul.addr %s222, 8
      %s224 = scalar_lea.vmem %s5, %s223
      %v225 = vld [vmem:[%s219] sm:$0xff]
      %v226 = vld [vmem:[%s219 + $0x8] sm:$0xff]
      %v227 = vadd.f32 %v225, %v226
      %228 = vadd.xlane.f32.xlu0 %v227
      %v229 = vpop.xlane.xlu0 %228
      %v230 = vmul.f32 %v229, 0.00390625
      %v231 = vld [vmem:[%s1] sm:$0xff]
      %v232 = vmul.f32 %v231, %v230
      %vm233 = vcmask 15360
      %v234 = vsel %vm233, %v232, 0.0
      %v235 = vrot.slane %v234, 4
      %v236 = vadd.f32 %v234, %v235
      %v237 = vrot.slane %v236, 2
      %v238 = vadd.f32 %v236, %v237
      %v239 = vrot.slane %v238, 1
      %v240 = vadd.f32 %v238, %v239
      %v241 = vld [vmem:[%s2] sm:$0x1]
      %v242 = vadd.f32 %v240, %v241
      %v243 = vmax.f32 %v242, 0.0
      %v244 = vld [vmem:[%s3] sm:$0xff]
      %v245 = vlaneseq
      %v246 = vshrl.u32 %v245, 7
      %v247 = vsub.s32 0, %v246
      %v248 = vrot.slane %v243, %v247
      %v249 = vmul.f32 %v244, %v248
      %v250 = vsel %vm233, %v249, 0.0
      %251 = vadd.xlane.f32.xlu0 %v250
      %v252 = vpop.xlane.xlu0 %251
      %v253 = vld [vmem:[%s4] sm:$0xff]
      %v254 = vadd.f32 %v252, %v253
      %v255 = vadd.f32 %v254, 3.0
      %v256 = vmax.f32 %v255, 0.0
      %v257 = vmin.f32 %v256, 6.0
      %v258 = vmul.f32 %v257, 0.16666667
      %v259 = vld [vmem:[%s219] sm:$0xff]
      %261 = vset.pattern.permute.xlu0 0
      %262 = vperm.xlu0 %261, %v258
      %v263 = vpop.permute.xlu0 %262
      %v265 = vmul.f32 %v259, %v263
      %v266 = vmul.f32 %v226, %v263
      %267 = vst [vmem:[%s224] sm:$0xff] %v265
      %268 = vst [vmem:[%s224 + $0x8] sm:$0xff] %v266
      %p269 = scmp.lt.s32.totalorder %s16, 1
      %s270 = scalar_select %p269, %s16, 1
      %s271 = smul.addr %s270, 2
      %s272 = smul.addr %s271, 8
      %s273 = scalar_lea.vmem %s5, %s272
      // Predicated region
      $region41: #{forward.1} parent=39 // pred_check
        %p274 = pneg %p144
      $region42: #{forward.1} parent=39 // pred_check_branch
        %276 = sbr.rel (%p274) target = $region44
      $region43: #{forward.1} parent=39 // pred_region
        _
      $region44: #{forward.1} parent=39 // pred_fallthru
        _
    $region40: #{forward.1} parent=5 // pred_fallthru
      _
    %p277 = scmp.le.s32.totalorder 2, %s11
    // Predicated region
    $region45: #{forward.1} parent=5 // pred_check
      %p278 = pneg %p277
    $region46: #{forward.1} parent=5 // pred_check_branch
      %280 = sbr.rel (%p278) target = $region48
    $region47: #{forward.1} parent=5 // pred_region
      %s281 = ssub.s32 %s11, 2
      // Predicated region
      $region49: #{forward.1} parent=47 // pred_check
        %p282 = pneg %p150
      $region50: #{forward.1} parent=47 // pred_check_branch
        %284 = sbr.rel (%p282) target = $region52
      $region51: #{forward.1} parent=47 // pred_region
        %p285 = scmp.lt.s32.totalorder %s17, 1
        %s286 = scalar_select %p285, %s17, 1
        %s287 = smul.addr %s286, 2
        %s288 = smul.addr %s287, 8
        %s289 = scalar_lea.vmem %s5, %s288
      $region52: #{forward.1} parent=47 // pred_fallthru
        _
    $region48: #{forward.1} parent=5 // pred_fallthru
      _
  $region6: #{forward.1} parent=0 // loop_footer
    %s15 = sadd.s32 1, %s11
  $region7: #{forward.1} parent=0 // loop_footer_branch
    %10 = sbr.rel target = $region3
  $region8: #{forward.1} parent=0 // loop_exit
    _

</llo_original>
